<compile_context>
chip_gen: v6e
topology: v6e:2x2x1
jax: 0.10.0
libtpu: 0.0.40
codegen_flags: <defaults>
</compile_context>

<pallas_src>
import functools

import jax
import jax.numpy as jnp
from jax import lax
from jax.experimental import pallas as pl
from jax.experimental.pallas import tpu as pltpu


# ------------------------------ Pallas kernel ------------------------------ #

def _patch_embed_kernel(xp_ref, w_ref, prm_ref, o_ref, *, eps, e_true, has_norm):
    """o = [LayerNorm](xp @ w + bias) for one row tile.

    prm_ref rows: 0 = bias, 1 = gamma, 2 = beta (rows 3..7 are zero padding).
    Columns >= e_true of w / params are exact zeros, so plain sums along the
    padded embed axis equal sums over the true E.
    """
    y = jnp.dot(xp_ref[...], w_ref[...],
                preferred_element_type=jnp.float32)          # (tm, E_pad) f32
    y = y + prm_ref[0:1, :]                                  # + bias
    if has_norm:
        inv_e = 1.0 / float(e_true)
        s1 = jnp.sum(y, axis=-1, keepdims=True)
        s2 = jnp.sum(y * y, axis=-1, keepdims=True)
        mean = s1 * inv_e
        var = jnp.maximum(s2 * inv_e - mean * mean, 0.0)     # single-pass var
        y = (y - mean) * lax.rsqrt(var + eps)                # rsqrt -> EUP
        y = y * prm_ref[1:2, :] + prm_ref[2:3, :]            # * gamma + beta
    o_ref[...] = y.astype(o_ref.dtype)


# ------------------------------ host wrapper ------------------------------- #

def patch_embed(x, conv_w, conv_b, gamma=None, beta=None,
                patch_size=4, eps=1e-5, tm=512,
                compute_dtype=jnp.bfloat16):
    """Pallas PatchEmbed forward.

    x:       (B, C, H, W)  float32 (NCHW, matching PyTorch)
    conv_w:  (E, C, p, p)  Conv2d weight
    conv_b:  (E,)          Conv2d bias
    gamma, beta: (E,) LayerNorm params or None (norm_layer=None path)
    returns: (B, E, Hp, Wp)
    """
    B, C, H, W = x.shape
    E = conv_w.shape[0]
    p = patch_size

    # F.pad semantics: pad right of W and bottom of H up to a multiple of p.
    pad_w = (-W) % p
    pad_h = (-H) % p
    if pad_w or pad_h:
        x = jnp.pad(x, ((0, 0), (0, 0), (0, pad_h), (0, pad_w)))
    Hp, Wp = (H + pad_h) // p, (W + pad_w) // p

    K = C * p * p
    M = B * Hp * Wp

    # Cast before the patchify transpose so the rearrangement moves half the
    # bytes when bf16 is used. Per-patch feature order is (c, kh, kw), matching
    # Conv2d weight.reshape(E, -1).
    xc = x.astype(compute_dtype)
    xp = (xc.reshape(B, C, Hp, p, Wp, p)
            .transpose(0, 2, 4, 1, 3, 5)
            .reshape(M, K))

    # Lane-dense embed dim: pad E to a multiple of 128 with zero columns.
    E_pad = ((E + 127) // 128) * 128
    wm = conv_w.reshape(E, K).T.astype(compute_dtype)            # (K, E)
    if E_pad != E:
        wm = jnp.pad(wm, ((0, 0), (0, E_pad - E)))

    # Pack bias / gamma / beta into one sublane-padded params block.
    has_norm = gamma is not None
    bias_row = jnp.pad(conv_b.astype(jnp.float32), (0, E_pad - E))
    if has_norm:
        g_row = jnp.pad(gamma.astype(jnp.float32), (0, E_pad - E))
        b2_row = jnp.pad(beta.astype(jnp.float32), (0, E_pad - E))
    else:
        g_row = jnp.zeros((E_pad,), jnp.float32)
        b2_row = jnp.zeros((E_pad,), jnp.float32)
    params = jnp.stack(
        [bias_row, g_row, b2_row] + [jnp.zeros((E_pad,), jnp.float32)] * 5,
        axis=0)                                                   # (8, E_pad)

    # Large row tile (mem-bound), multiple of 8, clamped for tiny problems.
    tm = max(8, min(tm, ((M + 7) // 8) * 8))
    M_pad = (-M) % tm
    if M_pad:
        xp = jnp.pad(xp, ((0, M_pad), (0, 0)))
    Mp = M + M_pad
    grid = (Mp // tm,)

    xp_spec = pl.BlockSpec((tm, K), lambda i: (i, 0))        # streamed rows
    w_spec = pl.BlockSpec((K, E_pad), lambda i: (0, 0))      # resident weight
    prm_spec = pl.BlockSpec((8, E_pad), lambda i: (0, 0))    # resident params
    out_spec = pl.BlockSpec((tm, E_pad), lambda i: (i, 0))
    out_shape = jax.ShapeDtypeStruct((Mp, E_pad), x.dtype)

    y = pl.pallas_call(
        functools.partial(_patch_embed_kernel, eps=eps, e_true=E,
                          has_norm=has_norm),
        out_shape=out_shape,
        grid_spec=pl.GridSpec(
            grid=grid,
            in_specs=[xp_spec, w_spec, prm_spec],
            out_specs=out_spec),
        compiler_params=pltpu.CompilerParams(
            dimension_semantics=("parallel",)),
    )(xp, wm, params)

    # Drop row/column padding; back to NCHW for parity with the PyTorch module.
    y = y[:M, :E]
    return y.reshape(B, Hp, Wp, E).transpose(0, 3, 1, 2)


# ----------------------------- pure-JAX reference --------------------------- #

def patch_embed_ref(x, conv_w, conv_b, gamma=None, beta=None,
                    patch_size=4, eps=1e-5):
    B, C, H, W = x.shape
    p = patch_size
    pad_w = (-W) % p
    pad_h = (-H) % p
    if pad_w or pad_h:
        x = jnp.pad(x, ((0, 0), (0, 0), (0, pad_h), (0, pad_w)))
    y = lax.conv_general_dilated(
        x, conv_w, window_strides=(p, p), padding="VALID",
        dimension_numbers=("NCHW", "OIHW", "NCHW"))
    y = y + conv_b.reshape(1, -1, 1, 1)
    if gamma is not None:
        B_, E, Hp, Wp = y.shape
        t = y.reshape(B_, E, Hp * Wp).transpose(0, 2, 1)
        mean = jnp.mean(t, axis=-1, keepdims=True)
        var = jnp.mean((t - mean) ** 2, axis=-1, keepdims=True)
        t = (t - mean) / jnp.sqrt(var + eps) * gamma + beta
        y = t.transpose(0, 2, 1).reshape(B_, E, Hp, Wp)
    return y


# ---------------------------------- main ------------------------------------ #

if __name__ == "__main__":
    key = jax.random.PRNGKey(0)
    k_x, k_w, k_b, k_g, k_bt, k_x2 = jax.random.split(key, 6)

    patch_size = 4
    B, C, E = 2, 4, 32

    # Shape 1: non-multiples of patch_size (exercises the pad path), tiny M.
    x = jax.random.normal(k_x, (B, C, 18, 14), dtype=jnp.float32)
    # Shape 2: larger spatial so the row grid has >1 tile.
    x2 = jax.random.normal(k_x2, (B, C, 64, 64), dtype=jnp.float32)

    conv_w = jax.random.normal(k_w, (E, C, patch_size, patch_size),
                               dtype=jnp.float32) * 0.05
    conv_b = jax.random.normal(k_b, (E,), dtype=jnp.float32) * 0.05
    gamma = 1.0 + 0.1 * jax.random.normal(k_g, (E,), dtype=jnp.float32)
    beta = 0.1 * jax.random.normal(k_bt, (E,), dtype=jnp.float32)

    # ---- f32 compute path: tight tolerance vs f32 conv reference ----
    out0 = jax.block_until_ready(
        patch_embed(x, conv_w, conv_b, patch_size=patch_size,
                    compute_dtype=jnp.float32))
    ref0 = patch_embed_ref(x, conv_w, conv_b, patch_size=patch_size)
    assert out0.shape == ref0.shape
    assert jnp.allclose(out0, ref0, atol=1e-4, rtol=1e-4)

    out1 = jax.block_until_ready(
        patch_embed(x, conv_w, conv_b, gamma, beta, patch_size=patch_size,
                    compute_dtype=jnp.float32))
    ref1 = patch_embed_ref(x, conv_w, conv_b, gamma, beta,
                           patch_size=patch_size)
    assert out1.shape == ref1.shape
    assert jnp.allclose(out1, ref1, atol=1e-4, rtol=1e-4)

    # ---- bf16 compute path (default fast path, multi-tile grid) ----
    # Compare against a reference whose inputs are quantized the same way so
    # only accumulation-order noise remains.
    xq = x2.astype(jnp.bfloat16).astype(jnp.float32)
    wq = conv_w.astype(jnp.bfloat16).astype(jnp.float32)
    out2 = jax.block_until_ready(
        patch_embed(x2, conv_w, conv_b, gamma, beta, patch_size=patch_size,
                    tm=256))                      # default compute_dtype=bf16
    ref2 = patch_embed_ref(xq, wq, conv_b, gamma, beta, patch_size=patch_size)
    assert out2.shape == ref2.shape
    assert jnp.allclose(out2, ref2, atol=5e-3, rtol=5e-3)

    print("KERNEL_OK")
</pallas_src>

<mosaic_0001>
module attributes {stable_mosaic.version = 11 : i64} {
  func.func @_patch_embed_kernel(%arg0: i32, %arg1: memref<40x64xf32, #tpu.memory_space<vmem>>, %arg2: memref<64x128xf32, #tpu.memory_space<vmem>>, %arg3: memref<8x128xf32, #tpu.memory_space<vmem>>, %arg4: memref<40x128xf32, #tpu.memory_space<vmem>>) attributes {dimension_semantics = [#tpu.dimension_semantics<parallel>], iteration_bounds = array<i64: 1>, scalar_prefetch = 0 : i64, scratch_operands = 0 : i64, tpu.core_type = #tpu.core_type<tc>, window_params = [{transform_indices = @transform_0, window_bounds = array<i64: 40, 64>}, {pipeline_mode = #tpu.pipeline_mode<synchronous>, transform_indices = @transform_1, window_bounds = array<i64: 64, 128>}, {pipeline_mode = #tpu.pipeline_mode<synchronous>, transform_indices = @transform_2, window_bounds = array<i64: 8, 128>}, {transform_indices = @transform_3, window_bounds = array<i64: 40, 128>}]} {
    %c0 = arith.constant 0 : index
    %c0_0 = arith.constant 0 : index
    %0 = vector.load %arg1[%c0, %c0_0] : memref<40x64xf32, #tpu.memory_space<vmem>>, vector<40x64xf32>
    %c0_1 = arith.constant 0 : index
    %c0_2 = arith.constant 0 : index
    %1 = vector.load %arg2[%c0_1, %c0_2] : memref<64x128xf32, #tpu.memory_space<vmem>>, vector<64x128xf32>
    %cst = arith.constant dense<0.000000e+00> : vector<40x128xf32>
    %2 = tpu.matmul %0, %1, %cst {dimension_numbers = #tpu.dot_dimension_numbers<[1], [0], [0], [1], [0, 0, 1, 1], [], []>} : vector<40x64xf32>, vector<64x128xf32>, vector<40x128xf32> -> vector<40x128xf32>
    %c0_3 = arith.constant 0 : index
    %c0_4 = arith.constant 0 : index
    %3 = vector.load %arg3[%c0_3, %c0_4] : memref<8x128xf32, #tpu.memory_space<vmem>>, vector<1x128xf32>
    %4 = vector.broadcast %3 : vector<1x128xf32> to vector<40x128xf32>
    %5 = arith.addf %2, %4 : vector<40x128xf32>
    %c0_5 = arith.constant 0 : index
    %c0_6 = arith.constant 0 : index
    %6 = vector.load %arg4[%c0_5, %c0_6] : memref<40x128xf32, #tpu.memory_space<vmem>>, vector<40x128xf32>
    tpu.vector_store %arg4[%c0_5, %c0_6], %5 {strides = array<i32>} : memref<40x128xf32, #tpu.memory_space<vmem>>, vector<40x128xf32>,
    return
  }
  func.func @transform_0(%arg0: i32) -> (i32, i32) {
    %c0_i32 = arith.constant 0 : i32
    %c0_i32_0 = arith.constant 0 : i32
    return %arg0, %c0_i32 : i32, i32
  }
  func.func @transform_1(%arg0: i32) -> (i32, i32) {
    %c0_i32 = arith.constant 0 : i32
    %c0_i32_0 = arith.constant 0 : i32
    %c0_i32_1 = arith.constant 0 : i32
    return %c0_i32, %c0_i32_0 : i32, i32
  }
  func.func @transform_2(%arg0: i32) -> (i32, i32) {
    %c0_i32 = arith.constant 0 : i32
    %c0_i32_0 = arith.constant 0 : i32
    %c0_i32_1 = arith.constant 0 : i32
    return %c0_i32, %c0_i32_0 : i32, i32
  }
  func.func @transform_3(%arg0: i32) -> (i32, i32) {
    %c0_i32 = arith.constant 0 : i32
    %c0_i32_0 = arith.constant 0 : i32
    return %arg0, %c0_i32 : i32, i32
  }
}

</mosaic_0001>

<llo_original>
// kernel: tpu_custom_call.1
$region0: #{tpu_custom_call.1}
  #allocation0 [shape = 'u32[]', space=smem, size = 0x4, offset = 0x4, fixed_abs, tag = 'smem constant byte address 0x4 - core index']
  #allocation1 [shape = 'u32[144,128]{1,0:T(1,128)}', space=vmem, size = 0x12000, scoped, tag = 'internal scratch']
  %s0 = inlined_call_operand.hbm [shape: f32[40,64], index: 0, kind: input, shape index: {}]
  %s1 = inlined_call_operand.hbm [shape: f32[64,128], index: 1, kind: input, shape index: {}]
  %s2 = inlined_call_operand.hbm [shape: f32[8,128], index: 2, kind: input, shape index: {}]
  %s3 = inlined_call_operand.hbm [shape: f32[40,128], index: 3, kind: output, shape index: {}]
  %s4 = sld [smem:[#allocation0]]
  $region34: #{tpu_custom_call.1} parent=0
    _
  %s6 = ssub.s32 1, %s4
  %s7 = scalar_select 0, %s6, %s4
  $region1: #{tpu_custom_call.1} parent=0
    #allocation2 [shape = 'u8[20480]{0}', space=vmem, size = 0x5000, scoped, tag = 'input window, operand 0, single buffered']
    #allocation3 [shape = 's32[1]{0}', space=sflag, size = 0x4, scoped, tag = 'scoped memory for tpu_custom_call.1']
    #allocation4 [shape = 's32[1]{0}', space=sflag, size = 0x4, scoped, tag = 'scoped memory for tpu_custom_call.1']
    #allocation5 [shape = 'u8[32768]{0}', space=vmem, size = 0x8000, scoped, tag = 'input window, operand 1, single buffered']
    #allocation6 [shape = 's32[1]{0}', space=sflag, size = 0x4, scoped, tag = 'scoped memory for tpu_custom_call.1']
    #allocation7 [shape = 'u8[4096]{0}', space=vmem, size = 0x1000, scoped, tag = 'input window, operand 2, single buffered']
    #allocation8 [shape = 'u8[20480]{0}', space=vmem, size = 0x5000, scoped, tag = 'output window, operand 0, single buffered']
    %8 = vsyncpa [#allocation3], 0
    %9 = vsyncpa [#allocation6], 0
    %10 = vsyncpa [#allocation4], 0
    // Predicated region
    $region2: #{tpu_custom_call.1} parent=1 // pred_check
      _
    $region3: #{tpu_custom_call.1} parent=1 // pred_check_branch
      %12 = sbr.rel (0) target = $region5
    $region4: #{tpu_custom_call.1} parent=1 // pred_region
      %s14 = ssub.s32 640, 640
      %15 = vsyncadd [#allocation3], %s14
      %s16 = sshll.u32 [#allocation2], 4
      %s17 = int_to_ptr.vmem [resolvable:$true] %s16
      %22 = dma.hbm_to_vmem [thread:$0]  %s0, 640, %s17, [#allocation3], 128, 128, 8
    $region5: #{tpu_custom_call.1} parent=1 // pred_fallthru
      _
    // Predicated region
    $region6: #{tpu_custom_call.1} parent=1 // pred_check
      _
    $region7: #{tpu_custom_call.1} parent=1 // pred_check_branch
      %24 = sbr.rel (0) target = $region9
    $region8: #{tpu_custom_call.1} parent=1 // pred_region
      %s26 = ssub.s32 1024, 1024
      %27 = vsyncadd [#allocation6], %s26
      %s28 = sshll.u32 [#allocation5], 4
      %s29 = int_to_ptr.vmem [resolvable:$true] %s28
      %34 = dma.hbm_to_vmem [thread:$0]  %s1, 1024, %s29, [#allocation6], 128, 128, 8
    $region9: #{tpu_custom_call.1} parent=1 // pred_fallthru
      _
    // Predicated region
    $region10: #{tpu_custom_call.1} parent=1 // pred_check
      _
    $region11: #{tpu_custom_call.1} parent=1 // pred_check_branch
      %36 = sbr.rel (0) target = $region13
    $region12: #{tpu_custom_call.1} parent=1 // pred_region
      %s38 = ssub.s32 128, 128
      %39 = vsyncadd [#allocation6], %s38
      %s41 = sshll.u32 [#allocation7], 4
      %s42 = int_to_ptr.vmem [resolvable:$true] %s41
      %44 = dma.hbm_to_vmem [thread:$0]  %s2, 128, %s42, [#allocation6]
    $region13: #{tpu_custom_call.1} parent=1 // pred_fallthru
      _
    // Predicated region
    $region14: #{tpu_custom_call.1} parent=1 // pred_check
      _
    $region15: #{tpu_custom_call.1} parent=1 // pred_check_branch
      %46 = sbr.rel (0) target = $region17
    $region16: #{tpu_custom_call.1} parent=1 // pred_region
      %47 = dma.done [#allocation3], 640
    $region17: #{tpu_custom_call.1} parent=1 // pred_fallthru
      _
    // Predicated region
    $region18: #{tpu_custom_call.1} parent=1 // pred_check
      _
    $region19: #{tpu_custom_call.1} parent=1 // pred_check_branch
      %49 = sbr.rel (0) target = $region21
    $region20: #{tpu_custom_call.1} parent=1 // pred_region
      %50 = dma.done [#allocation6], 1024
    $region21: #{tpu_custom_call.1} parent=1 // pred_fallthru
      _
    // Predicated region
    $region22: #{tpu_custom_call.1} parent=1 // pred_check
      _
    $region23: #{tpu_custom_call.1} parent=1 // pred_check_branch
      %52 = sbr.rel (0) target = $region25
    $region24: #{tpu_custom_call.1} parent=1 // pred_region
      %53 = dma.done [#allocation6], 128
    $region25: #{tpu_custom_call.1} parent=1 // pred_fallthru
      _
    %v54 = vld [vmem:[#allocation2] sm:$0xff]
    %v55 = vld [vmem:[#allocation2 + $0x8] sm:$0xff]
    %v56 = vld [vmem:[#allocation2 + $0x10] sm:$0xff]
    %v57 = vld [vmem:[#allocation2 + $0x18] sm:$0xff]
    %v58 = vld [vmem:[#allocation2 + $0x20] sm:$0xff]
    %v59 = vld [vmem:[#allocation5] sm:$0xff]
    %v60 = vld [vmem:[#allocation5 + $0x8] sm:$0xff]
    %v61 = vld [vmem:[#allocation5 + $0x10] sm:$0xff]
    %v62 = vld [vmem:[#allocation5 + $0x18] sm:$0xff]
    %v63 = vld [vmem:[#allocation5 + $0x20] sm:$0xff]
    %v64 = vld [vmem:[#allocation5 + $0x28] sm:$0xff]
    %v65 = vld [vmem:[#allocation5 + $0x30] sm:$0xff]
    %v66 = vld [vmem:[#allocation5 + $0x38] sm:$0xff]
    %v67 = vld [vmem:[#allocation7] sm:$0x1]
    %v68 = vlaneseq
    %v69 = vshrl.u32 %v68, 7
    %v70 = vsub.s32 0, %v69
    %v71 = vrot.slane %v67, %v70
    %vm72 = vcmask 523264
    %v74 = vsel %vm72, %v54, 0
    %v77 = vsel %vm72, %v55, 0
    %v80 = vsel %vm72, %v56, 0
    %v83 = vsel %vm72, %v57, 0
    %v86 = vsel %vm72, %v58, 0
    %88 = vmatprep.subr.mxu0 0.0
    %89 = vmatpush1.msra.mxu0 0.0
    %90 = vmatprep.subr.mxu0 0.0
    %91 = vmatpush1.msra.mxu0 0.0
    %92 = vmatprep.subr.mxu0 0.0
    %93 = vmatpush1.msra.mxu0 0.0
    %94 = vmatprep.subr.mxu0 0.0
    %95 = vmatpush1.msra.mxu0 0.0
    %96 = vmatprep.subr.mxu0 0.0
    %97 = vmatpush1.msra.mxu0 0.0
    %98 = vmatprep.subr.mxu0 0.0
    %99 = vmatpush1.msra.mxu0 0.0
    %100 = vmatprep.subr.mxu0 0.0
    %101 = vmatpush1.msra.mxu0 0.0
    %102 = vmatprep.subr.mxu0 0.0
    %103 = vmatpush1.msra.mxu0 0.0
    %104 = vmatprep.subr.mxu0 0.0
    %105 = vmatpush1.msra.mxu0 %v66
    %106 = vmatprep.subr.mxu0 0.0
    %107 = vmatpush1.msra.mxu0 %v65
    %108 = vmatprep.subr.mxu0 0.0
    %109 = vmatpush1.msra.mxu0 %v64
    %110 = vmatprep.subr.mxu0 0.0
    %111 = vmatpush1.msra.mxu0 %v63
    %112 = vmatprep.subr.mxu0 0.0
    %113 = vmatpush1.msra.mxu0 %v62
    %114 = vmatprep.subr.mxu0 0.0
    %115 = vmatpush1.msra.mxu0 %v61
    %116 = vmatprep.subr.mxu0 0.0
    %117 = vmatpush1.msra.mxu0 %v60
    %118 = vmatprep.subr.mxu0 0.0
    %119 = vmatpush1.msra.mxu0 %v59
    %120 = vmatprep.subr.mxu0 0.0
    %121 = vmatpush2.msra.mxu0 0.0
    %122 = vmatprep.subr.mxu0 0.0
    %123 = vmatpush2.msra.mxu0 0.0
    %124 = vmatprep.subr.mxu0 0.0
    %125 = vmatpush2.msra.mxu0 0.0
    %126 = vmatprep.subr.mxu0 0.0
    %127 = vmatpush2.msra.mxu0 0.0
    %128 = vmatprep.subr.mxu0 0.0
    %129 = vmatpush2.msra.mxu0 0.0
    %130 = vmatprep.subr.mxu0 0.0
    %131 = vmatpush2.msra.mxu0 0.0
    %132 = vmatprep.subr.mxu0 0.0
    %133 = vmatpush2.msra.mxu0 0.0
    %134 = vmatprep.subr.mxu0 0.0
    %135 = vmatpush2.msra.mxu0 0.0
    %136 = vmatprep.subr.mxu0 0.0
    %137 = vmatpush2.msra.mxu0 0.0
    %138 = vmatprep.subr.mxu0 0.0
    %139 = vmatpush2.msra.mxu0 0.0
    %140 = vmatprep.subr.mxu0 0.0
    %141 = vmatpush2.msra.mxu0 0.0
    %142 = vmatprep.subr.mxu0 0.0
    %143 = vmatpush2.msra.mxu0 0.0
    %144 = vmatprep.subr.mxu0 0.0
    %145 = vmatpush2.msra.mxu0 0.0
    %146 = vmatprep.subr.mxu0 0.0
    %147 = vmatpush2.msra.mxu0 0.0
    %148 = vmatprep.subr.mxu0 0.0
    %149 = vmatpush2.msra.mxu0 0.0
    %150 = vmatprep.subr.mxu0 0.0
    %151 = vmatpush2.msra.mxu0 0.0
    %152 = vmatprep.mubr.f32.mxu0 0.0
    %153 = vmatmul.mubr.f32.gmra.mxu0 %v74
    %v154 = vpop.f32.mrf.mxu0
    %v155 = vadd.f32 %v71, %v154
    %v156 = vpop.f32.mrf.mxu0
    %157 = vmatprep.mubr.f32.mxu0 0.0
    %158 = vmatmul.mubr.f32.gmra.mxu0 %v77
    %v159 = vpop.f32.mrf.mxu0
    %v160 = vadd.f32 %v71, %v159
    %v161 = vpop.f32.mrf.mxu0
    %162 = vmatprep.mubr.f32.mxu0 0.0
    %163 = vmatmul.mubr.f32.gmra.mxu0 %v80
    %v164 = vpop.f32.mrf.mxu0
    %v165 = vadd.f32 %v71, %v164
    %v166 = vpop.f32.mrf.mxu0
    %167 = vmatprep.mubr.f32.mxu0 0.0
    %168 = vmatmul.mubr.f32.gmra.mxu0 %v83
    %v169 = vpop.f32.mrf.mxu0
    %v170 = vadd.f32 %v71, %v169
    %v171 = vpop.f32.mrf.mxu0
    %172 = vmatprep.mubr.f32.mxu0 0.0
    %173 = vmatmul.mubr.f32.gmra.mxu0 %v86
    %v174 = vpop.f32.mrf.mxu0
    %v175 = vadd.f32 %v71, %v174
    %v176 = vpop.f32.mrf.mxu0
    %177 = vdwg.mxu0
    %178 = vst [vmem:[#allocation8] sm:$0xff] %v155
    %179 = vst [vmem:[#allocation8 + $0x8] sm:$0xff] %v160
    %180 = vst [vmem:[#allocation8 + $0x10] sm:$0xff] %v165
    %181 = vst [vmem:[#allocation8 + $0x18] sm:$0xff] %v170
    %182 = vst [vmem:[#allocation8 + $0x20] sm:$0xff] %v175
    // Predicated region
    $region26: #{tpu_custom_call.1} parent=1 // pred_check
      _
    $region27: #{tpu_custom_call.1} parent=1 // pred_check_branch
      %184 = sbr.rel (0) target = $region29
    $region28: #{tpu_custom_call.1} parent=1 // pred_region
      %s186 = ssub.s32 640, 640
      %187 = vsyncadd [#allocation4], %s186
      %s188 = sshll.u32 [#allocation8], 4
      %s189 = int_to_ptr.vmem [resolvable:$true] %s188
      %194 = dma.vmem_to_hbm [thread:$0]  %s189, 640, %s3, [#allocation4], 128, 128, 8
    $region29: #{tpu_custom_call.1} parent=1 // pred_fallthru
      _
    // Predicated region
    $region30: #{tpu_custom_call.1} parent=1 // pred_check
      _
    $region31: #{tpu_custom_call.1} parent=1 // pred_check_branch
      %196 = sbr.rel (0) target = $region33
    $region32: #{tpu_custom_call.1} parent=1 // pred_region
      %197 = dma.done [#allocation4], 640
    $region33: #{tpu_custom_call.1} parent=1 // pred_fallthru
      _
    %198 = vsyncpa [#allocation3], 1
    %199 = vsyncpa [#allocation6], 1
    %200 = vsyncpa [#allocation4], 1

</llo_original>
